<compile_context>
chip_gen: v7x
topology: tpu7x:2x2x1
jax: 0.10.0
libtpu: 0.0.40
codegen_flags: <defaults>
</compile_context>

<pallas_src>
import jax
import jax.numpy as jnp
from jax.experimental import pallas as pl
from jax.experimental.pallas import tpu as pltpu


def _round_up(x, m):
    return (x + m - 1) // m * m


def _sublane_multiple(dtype):
    return {4: 8, 2: 16, 1: 32}[jnp.dtype(dtype).itemsize]


def _siren_kernel(x_ref, w_ref, o_ref):
    # MXU matmul, f32 accumulation.  omega_0 and the bias are already folded
    # into the augmented weight, so the only VALU work here is sin.
    y = jnp.dot(x_ref[...], w_ref[...], preferred_element_type=jnp.float32)
    o_ref[...] = jnp.sin(y).astype(o_ref.dtype)


def siren_embedding(x, weight, bias, omega_0=30.0, tm=4096, out_dtype=None):
    """x: [..., in_features]; weight: [out_features, in_features] (PyTorch layout);
    bias: [out_features]. Returns sin(omega_0 * (x @ weight.T + bias))."""
    in_features = x.shape[-1]
    out_features = weight.shape[0]
    lead_shape = x.shape[:-1]
    if out_dtype is None:
        out_dtype = x.dtype

    # --- Fold omega_0 and the bias into an augmented weight (wrapper-side, cheap).
    #     x_aug = [x, 1];  w_aug = [[omega0 * W^T], [omega0 * b]];  y = x_aug @ w_aug.
    x2 = x.reshape(-1, in_features).astype(jnp.float32)
    n = x2.shape[0]
    x_aug = jnp.concatenate([x2, jnp.ones((n, 1), jnp.float32)], axis=1)
    in_eff = in_features + 1

    w_t = weight.T.astype(jnp.float32) * jnp.float32(omega_0)    # [in, out]
    b1 = bias.astype(jnp.float32) * jnp.float32(omega_0)         # [out]
    w_aug = jnp.concatenate([w_t, b1[None, :]], axis=0)          # [in+1, out]

    # --- Output width: lane-dense (padded to 128) only when padding overhead is
    #     small; otherwise write the exact width with masked stores (vst slot has
    #     slack since sin binds the VALU).
    out_p = _round_up(out_features, 128)
    if out_p <= int(1.15 * out_features):
        out_width = out_p
    else:
        out_width = out_features
    if out_width != out_features:
        w_aug = jnp.pad(w_aug, ((0, 0), (0, out_width - out_features)))

    # --- Row tile: dtype-aware sublane multiple, sized to amortize per-step
    #     pipeline overhead; shrink if double-buffered tiles exceed VMEM budget.
    tm_mult = max(_sublane_multiple(jnp.float32), _sublane_multiple(out_dtype))
    tm_eff = max(tm_mult, min(_round_up(tm, tm_mult), _round_up(n, tm_mult)))

    lane = 128
    out_itemsize = jnp.dtype(out_dtype).itemsize

    def tile_bytes(tm_v):
        # VMEM tiles are lane-padded to 128 on the last dim and double-buffered.
        x_tile = tm_v * _round_up(in_eff, lane) * 4
        o_tile = tm_v * _round_up(out_width, lane) * out_itemsize
        return 2 * (x_tile + o_tile)

    while tm_eff > tm_mult and tile_bytes(tm_eff) > (40 << 20):
        tm_eff = max(tm_mult, _round_up(tm_eff // 2, tm_mult))

    n_p = _round_up(n, tm_eff)
    if n_p != n:
        x_aug = jnp.pad(x_aug, ((0, n_p - n), (0, 0)))
    grid = (n_p // tm_eff,)

    resident_bytes = 2 * _round_up(in_eff, 8) * _round_up(out_width, lane) * 4
    vmem_limit = min(
        max(tile_bytes(tm_eff) + resident_bytes + (4 << 20), 16 << 20),
        48 << 20,  # leave headroom on v7x's 64 MiB per-TC VMEM
    )

    cost = pl.CostEstimate(
        flops=2 * n * in_eff * out_features,
        transcendentals=n * out_features,
        bytes_accessed=(4 * (n * in_eff + in_eff * out_width)
                        + out_itemsize * n * out_width),
    )

    out = pl.pallas_call(
        _siren_kernel,
        out_shape=jax.ShapeDtypeStruct((n_p, out_width), out_dtype),
        grid_spec=pltpu.PrefetchScalarGridSpec(
            num_scalar_prefetch=0,
            grid=grid,
            in_specs=[
                pl.BlockSpec((tm_eff, in_eff), lambda i: (i, 0)),
                pl.BlockSpec((in_eff, out_width), lambda i: (0, 0)),
            ],
            out_specs=pl.BlockSpec((tm_eff, out_width), lambda i: (i, 0)),
        ),
        compiler_params=pltpu.CompilerParams(
            dimension_semantics=("parallel",),
            vmem_limit_bytes=vmem_limit,
        ),
        cost_estimate=cost,
    )(x_aug, w_aug)

    if n_p != n or out_width != out_features:
        out = out[:n, :out_features]
    return out.reshape(*lead_shape, out_features)


def init_siren_params(key, in_features, out_features):
    """Deterministic init matching SirenEmbedding.__init__:
    weight ~ U(-1/in_features, 1/in_features)  (first-layer sine init),
    bias   ~ U(-1/sqrt(in_features), 1/sqrt(in_features))  (default nn.Linear)."""
    kw, kb = jax.random.split(key)
    w_bound = 1.0 / in_features
    weight = jax.random.uniform(
        kw, (out_features, in_features), jnp.float32, -w_bound, w_bound
    )
    b_bound = 1.0 / jnp.sqrt(jnp.float32(in_features))
    bias = jax.random.uniform(
        kb, (out_features,), jnp.float32, -b_bound, b_bound
    )
    return weight, bias


if __name__ == "__main__":
    key = jax.random.PRNGKey(0)
    k_x, k_p, k_x2, k_p2 = jax.random.split(key, 4)

    omega_0 = 30.0

    # Case 1: small out_features (32) -> unpadded, masked-store output path.
    batch, seq, in_features, out_features = 2, 8, 4, 32
    x = jax.random.normal(k_x, (batch, seq, in_features), jnp.float32)
    weight, bias = init_siren_params(k_p, in_features, out_features)
    ref = jnp.sin(omega_0 * (x @ weight.T + bias))

    out = siren_embedding(x, weight, bias, omega_0)          # single-tile grid
    out = jax.block_until_ready(out)
    assert out.shape == (batch, seq, out_features)
    assert jnp.allclose(out, ref, atol=1e-4, rtol=1e-4)

    out_tiled = siren_embedding(x, weight, bias, omega_0, tm=8)   # grid > 1
    out_tiled = jax.block_until_ready(out_tiled)
    assert jnp.allclose(out_tiled, ref, atol=1e-4, rtol=1e-4)

    # Case 2: out_features=120 -> lane-dense padded output path (pad to 128).
    in2, out2 = 3, 120
    x_b = jax.random.normal(k_x2, (batch, seq, in2), jnp.float32)
    w_b, b_b = init_siren_params(k_p2, in2, out2)
    ref_b = jnp.sin(omega_0 * (x_b @ w_b.T + b_b))

    out_b = siren_embedding(x_b, w_b, b_b, omega_0)
    out_b = jax.block_until_ready(out_b)
    assert out_b.shape == (batch, seq, out2)
    assert jnp.allclose(out_b, ref_b, atol=1e-4, rtol=1e-4)

    print("KERNEL_OK")
</pallas_src>

<mosaic_0001>
module attributes {stable_mosaic.version = 11 : i64} {
  func.func @_siren_kernel(%arg0: i32, %arg1: memref<16x5xf32, #tpu.memory_space<vmem>>, %arg2: memref<5x32xf32, #tpu.memory_space<vmem>>, %arg3: memref<16x32xf32, #tpu.memory_space<vmem>>) attributes {dimension_semantics = [#tpu.dimension_semantics<parallel>], iteration_bounds = array<i64: 1>, scalar_prefetch = 0 : i64, scratch_operands = 0 : i64, tpu.core_type = #tpu.core_type<tc>, window_params = [{transform_indices = @transform_0, window_bounds = array<i64: 16, 5>}, {pipeline_mode = #tpu.pipeline_mode<synchronous>, transform_indices = @transform_1, window_bounds = array<i64: 5, 32>}, {transform_indices = @transform_2, window_bounds = array<i64: 16, 32>}]} {
    %c0 = arith.constant 0 : index
    %c0_0 = arith.constant 0 : index
    %0 = vector.load %arg1[%c0, %c0_0] : memref<16x5xf32, #tpu.memory_space<vmem>>, vector<16x5xf32>
    %c0_1 = arith.constant 0 : index
    %c0_2 = arith.constant 0 : index
    %1 = vector.load %arg2[%c0_1, %c0_2] : memref<5x32xf32, #tpu.memory_space<vmem>>, vector<5x32xf32>
    %cst = arith.constant dense<0.000000e+00> : vector<16x32xf32>
    %2 = tpu.matmul %0, %1, %cst {dimension_numbers = #tpu.dot_dimension_numbers<[1], [0], [0], [1], [0, 0, 1, 1], [], []>} : vector<16x5xf32>, vector<5x32xf32>, vector<16x32xf32> -> vector<16x32xf32>
    %3 = math.sin %2 : vector<16x32xf32>
    %c0_3 = arith.constant 0 : index
    %c0_4 = arith.constant 0 : index
    %4 = vector.load %arg3[%c0_3, %c0_4] : memref<16x32xf32, #tpu.memory_space<vmem>>, vector<16x32xf32>
    tpu.vector_store %arg3[%c0_3, %c0_4], %3 {strides = array<i32>} : memref<16x32xf32, #tpu.memory_space<vmem>>, vector<16x32xf32>,
    return
  }
  func.func @transform_0(%arg0: i32) -> (i32, i32) {
    %c0_i32 = arith.constant 0 : i32
    %c0_i32_0 = arith.constant 0 : i32
    return %arg0, %c0_i32 : i32, i32
  }
  func.func @transform_1(%arg0: i32) -> (i32, i32) {
    %c0_i32 = arith.constant 0 : i32
    %c0_i32_0 = arith.constant 0 : i32
    %c0_i32_1 = arith.constant 0 : i32
    return %c0_i32, %c0_i32_0 : i32, i32
  }
  func.func @transform_2(%arg0: i32) -> (i32, i32) {
    %c0_i32 = arith.constant 0 : i32
    %c0_i32_0 = arith.constant 0 : i32
    return %arg0, %c0_i32 : i32, i32
  }
}

</mosaic_0001>

<llo_original>
// kernel: tpu_custom_call.1
$region0: #{tpu_custom_call.1}
  #allocation0 [shape = 'u32[]', space=smem, size = 0x4, offset = 0x4, fixed_abs, tag = 'smem constant byte address 0x4 - core index']
  #allocation1 [shape = 'u32[144,128]{1,0:T(1,128)}', space=vmem, size = 0x12000, scoped, tag = 'internal scratch']
  %s0 = inlined_call_operand.vmem [shape: f32[16,5], index: 0, kind: input, shape index: {}]
  %s1 = inlined_call_operand.vmem [shape: f32[5,32], index: 1, kind: input, shape index: {}]
  %s2 = inlined_call_operand.hbm [shape: f32[16,32], index: 2, kind: output, shape index: {}]
  %s3 = sld [smem:[#allocation0]]
  $region18: #{tpu_custom_call.1} parent=0
    _
  %s5 = ssub.s32 1, %s3
  %s6 = scalar_select 0, %s5, %s3
  $region1: #{tpu_custom_call.1} parent=0
    #allocation2 [shape = 'u8[8192]{0}', space=vmem, size = 0x2000, scoped, tag = 'output window, operand 0, single buffered']
    #allocation3 [shape = 's32[1]{0}', space=sflag, size = 0x4, scoped, tag = 'scoped memory for tpu_custom_call.1']
    %7 = vsyncpa [#allocation3], 0
    // Predicated region
    $region2: #{tpu_custom_call.1} parent=1 // pred_check
      _
    $region3: #{tpu_custom_call.1} parent=1 // pred_check_branch
      %9 = sbr.rel (0) target = $region5
    $region4: #{tpu_custom_call.1} parent=1 // pred_region
      _
    $region5: #{tpu_custom_call.1} parent=1 // pred_fallthru
      _
    // Predicated region
    $region6: #{tpu_custom_call.1} parent=1 // pred_check
      _
    $region7: #{tpu_custom_call.1} parent=1 // pred_check_branch
      %11 = sbr.rel (0) target = $region9
    $region8: #{tpu_custom_call.1} parent=1 // pred_region
      _
    $region9: #{tpu_custom_call.1} parent=1 // pred_fallthru
      _
    %v12 = vld [vmem:[%s0] sm:$0xff]
    %v13 = vld [vmem:[%s0 + $0x8] sm:$0xff]
    %v14 = vld [vmem:[%s1] sm:$0x1f]
    %vm15 = vcmask 39936
    %v17 = vsel %vm15, %v12, 0
    %v20 = vsel %vm15, %v13, 0
    %vm22 = vcmask 1044480
    %v24 = vsel %vm22, %v14, 0
    %26 = vmatprep.subr.mxu0 0.0
    %27 = vmatpush1.msra.mxu0 %v24
    %28 = vmatprep.subr.mxu0 0.0
    %29 = vmatpush1.msra.mxu0 0.0
    %30 = vmatprep.subr.mxu0 0.0
    %31 = vmatpush1.msra.mxu0 0.0
    %32 = vmatprep.subr.mxu0 0.0
    %33 = vmatpush1.msra.mxu0 0.0
    %34 = vmatprep.subr.mxu0 0.0
    %35 = vmatpush1.msra.mxu0 0.0
    %36 = vmatprep.subr.mxu0 0.0
    %37 = vmatpush1.msra.mxu0 0.0
    %38 = vmatprep.subr.mxu0 0.0
    %39 = vmatpush1.msra.mxu0 0.0
    %40 = vmatprep.subr.mxu0 0.0
    %41 = vmatpush1.msra.mxu0 0.0
    %42 = vmatprep.subr.mxu0 0.0
    %43 = vmatpush1.msra.mxu0 0.0
    %44 = vmatprep.subr.mxu0 0.0
    %45 = vmatpush1.msra.mxu0 0.0
    %46 = vmatprep.subr.mxu0 0.0
    %47 = vmatpush1.msra.mxu0 0.0
    %48 = vmatprep.subr.mxu0 0.0
    %49 = vmatpush1.msra.mxu0 0.0
    %50 = vmatprep.subr.mxu0 0.0
    %51 = vmatpush1.msra.mxu0 0.0
    %52 = vmatprep.subr.mxu0 0.0
    %53 = vmatpush1.msra.mxu0 0.0
    %54 = vmatprep.subr.mxu0 0.0
    %55 = vmatpush1.msra.mxu0 0.0
    %56 = vmatprep.subr.mxu0 0.0
    %57 = vmatpush1.msra.mxu0 0.0
    %58 = vmatprep.subr.mxu0 0.0
    %59 = vmatpush1.msra.mxu0 0.0
    %60 = vmatprep.subr.mxu0 0.0
    %61 = vmatpush1.msra.mxu0 0.0
    %62 = vmatprep.subr.mxu0 0.0
    %63 = vmatpush1.msra.mxu0 0.0
    %64 = vmatprep.subr.mxu0 0.0
    %65 = vmatpush1.msra.mxu0 0.0
    %66 = vmatprep.subr.mxu0 0.0
    %67 = vmatpush1.msra.mxu0 0.0
    %68 = vmatprep.subr.mxu0 0.0
    %69 = vmatpush1.msra.mxu0 0.0
    %70 = vmatprep.subr.mxu0 0.0
    %71 = vmatpush1.msra.mxu0 0.0
    %72 = vmatprep.subr.mxu0 0.0
    %73 = vmatpush1.msra.mxu0 0.0
    %74 = vmatprep.subr.mxu0 0.0
    %75 = vmatpush1.msra.mxu0 0.0
    %76 = vmatprep.subr.mxu0 0.0
    %77 = vmatpush1.msra.mxu0 0.0
    %78 = vmatprep.subr.mxu0 0.0
    %79 = vmatpush1.msra.mxu0 0.0
    %80 = vmatprep.subr.mxu0 0.0
    %81 = vmatpush1.msra.mxu0 0.0
    %82 = vmatprep.subr.mxu0 0.0
    %83 = vmatpush1.msra.mxu0 0.0
    %84 = vmatprep.subr.mxu0 0.0
    %85 = vmatpush1.msra.mxu0 0.0
    %86 = vmatprep.subr.mxu0 0.0
    %87 = vmatpush1.msra.mxu0 0.0
    %88 = vmatprep.subr.mxu0 0.0
    %89 = vmatpush1.msra.mxu0 0.0
    %90 = vmatprep.mubr.f32.mxu0 0.0
    %91 = vmatmul.mubr.f32.gmra.mrb[0].mxu0 %v17
    %v92 = vpop.f32.mrb[0].mxu0
    %v93 = vadd.f32 0.0, %v92
    %v94 = vpop.f32.mrb[0].mxu0
    %95 = vmatprep.mubr.f32.mxu0 0.0
    %96 = vmatmul.mubr.f32.gmra.mrb[0].mxu0 %v20
    %v97 = vpop.f32.mrb[0].mxu0
    %v98 = vadd.f32 0.0, %v97
    %v99 = vpop.f32.mrb[0].mxu0
    %100 = vdwg.mxu0
    %v101 = vand.u32 2147483647, %v93
    %vm102 = vcmp.le.f32.partialorder %v101, 0.7853982
    %vm103 = vcmp.lt.s32.totalorder %v93, 0
    %v104 = vand.u32 %v93, 2139095040
    %v105 = vshrl.u32 %v104, 23
    %v106 = vsub.s32 %v105, 127
    %v107 = vand.u32 2147483647, %v93
    %v108 = vand.u32 %v107, 8388607
    %v109 = vor.u32 %v108, 8388608
    %v110 = vsub.s32 0, %v109
    %v111 = vadd.s32 %v106, 1
    %vm112 = vcmp.gt.s32.totalorder %v111, 0
    %v113 = vsel %vm112, %v111, 0
    %v114 = vshrl.u32 %v113, 5
    %v115 = vand.u32 %v113, 31
    %v116 = vsub.s32 32, %v115
    %v117 = vshrl.u32 683565275, %v116
    %v118 = vshll.u32 683565275, %v115
    %v119 = vshrl.u32 2475754826, %v116
    %v120 = vor.u32 %v118, %v119
    %v121 = vshll.u32 2475754826, %v115
    %v122 = vshrl.u32 2131351028, %v116
    %v123 = vor.u32 %v121, %v122
    %v124 = vshll.u32 2131351028, %v115
    %v125 = vshrl.u32 2102212464, %v116
    %v126 = vor.u32 %v124, %v125
    %v127 = vshll.u32 2102212464, %v115
    %v128 = vshrl.u32 920167782, %v116
    %v129 = vor.u32 %v127, %v128
    %v130 = vshll.u32 920167782, %v115
    %v131 = vshrl.u32 1326507024, %v116
    %v132 = vor.u32 %v130, %v131
    %vm133 = vcmp.lt.s32.totalorder %v114, 1
    %vm134 = vcmp.lt.s32.totalorder %v114, 2
    %vm135 = vcmp.lt.s32.totalorder %v114, 3
    %vm136 = vcmp.lt.s32.totalorder %v114, 4
    %v137 = vsel %vm133, %v117, %v120
    %v138 = vsel %vm136, %v126, 2102212464
    %v139 = vsel %vm135, %v123, %v138
    %v140 = vsel %vm134, %v137, %v139
    %v141 = vsel %vm133, %v120, %v123
    %v142 = vsel %vm136, %v129, 920167782
    %v143 = vsel %vm135, %v126, %v142
    %v144 = vsel %vm134, %v141, %v143
    %v145 = vsel %vm133, %v123, %v126
    %v146 = vsel %vm136, %v132, 1326507024
    %v147 = vsel %vm135, %v129, %v146
    %v148 = vsel %vm134, %v145, %v147
    %v149 = vshll.u32 %v109, 8
    %v150 = vmul.u32.u64.compose %v149, %v148
    %v151 = vextract.low.u32 %v150
    %v152 = vextract.high.u32 %v150
    %v153 = vmul.u32.u64.compose %v149, %v144
    %v154 = vextract.low.u32 %v153
    %v155 = vextract.high.u32 %v153
    %v156 = vmul.u32 %v149, %v140
    %v157 = vadd.s32 %v152, %v154
    %vm158 = vc.u32 %v152, %v154
    %v159 = vadd.s32 %v155, 1
    %v160 = vsel %vm158, %v159, %v155
    %v161 = vadd.s32 %v156, %v160
    %v162 = vadd.s32 %v161, 536870912
    %v163 = vshrl.u32 %v162, 30
    %v164 = vshll.u32 %v163, 30
    %v165 = vsub.s32 %v161, %v164
    %vm166 = vcmp.lt.s32.totalorder %v165, 0
    %v167 = vsub.s32 0, %v165
    %v168 = vsel %vm166, %v167, %v165
    %v169 = vclz %v168
    %v170 = vsub.s32 %v169, 2
    %vm171 = vcmp.gt.s32.totalorder 0, %v170
    %v172 = vsel %vm171, 0, %v170
    %v173 = vsub.s32 32, %v172
    %v174 = vshll.u32 %v165, %v172
    %v175 = vshrl.u32 %v157, %v173
    %v176 = vor.u32 %v174, %v175
    %v177 = vsub.s32 4294967266, %v172
    %v178 = vadd.s32 %v177, 127
    %v179 = vshll.u32 %v178, 23
    %v180 = vor.u32 4788187, %v179
    %v181 = vand.u32 2147483647, %v180
    %v183 = vcvt.s32.f32 %v176
    %v184 = vmul.f32 %v183, %v181
    %v185 = vxor.u32 %v184, 2147483648
    %v186 = vsel %vm103, %v185, %v184
    %v187 = vsub.s32 4, %v163
    %v188 = vsel %vm103, %v187, %v163
    %v189 = vsel %vm102, %v93, %v186
    %v190 = vsel %vm102, 0, %v188
    %v191 = vcosq.f32.pop %v189
    %v192 = vsinq.f32.pop %v189
    %vm193 = vweird.f32 %v93
    %v194 = vadd.s32 %v190, 3
    %v195 = vand.u32 %v194, 3
    %vm196 = vcmp.lt.s32.totalorder %v195, 2
    %vm197 = vcmp.eq.s32.totalorder %v195, 0
    %v198 = vxor.u32 %v192, 2147483648
    %v199 = vsel %vm197, %v191, %v198
    %vm200 = vcmp.eq.s32.totalorder %v195, 2
    %v201 = vxor.u32 %v191, 2147483648
    %v202 = vsel %vm200, %v201, %v192
    %v203 = vsel %vm196, %v199, %v202
    %v204 = vsel %vm193, nan, %v203
    %v205 = vand.u32 2147483647, %v98
    %vm206 = vcmp.le.f32.partialorder %v205, 0.7853982
    %vm207 = vcmp.lt.s32.totalorder %v98, 0
    %v208 = vand.u32 %v98, 2139095040
    %v209 = vshrl.u32 %v208, 23
    %v210 = vsub.s32 %v209, 127
    %v211 = vand.u32 2147483647, %v98
    %v212 = vand.u32 %v211, 8388607
    %v213 = vor.u32 %v212, 8388608
    %v214 = vsub.s32 0, %v213
    %v215 = vadd.s32 %v210, 1
    %vm216 = vcmp.gt.s32.totalorder %v215, 0
    %v217 = vsel %vm216, %v215, 0
    %v218 = vshrl.u32 %v217, 5
    %v219 = vand.u32 %v217, 31
    %v220 = vsub.s32 32, %v219
    %v221 = vshrl.u32 683565275, %v220
    %v222 = vshll.u32 683565275, %v219
    %v223 = vshrl.u32 2475754826, %v220
    %v224 = vor.u32 %v222, %v223
    %v225 = vshll.u32 2475754826, %v219
    %v226 = vshrl.u32 2131351028, %v220
    %v227 = vor.u32 %v225, %v226
    %v228 = vshll.u32 2131351028, %v219
    %v229 = vshrl.u32 2102212464, %v220
    %v230 = vor.u32 %v228, %v229
    %v231 = vshll.u32 2102212464, %v219
    %v232 = vshrl.u32 920167782, %v220
    %v233 = vor.u32 %v231, %v232
    %v234 = vshll.u32 920167782, %v219
    %v235 = vshrl.u32 1326507024, %v220
    %v236 = vor.u32 %v234, %v235
    %vm237 = vcmp.lt.s32.totalorder %v218, 1
    %vm238 = vcmp.lt.s32.totalorder %v218, 2
    %vm239 = vcmp.lt.s32.totalorder %v218, 3
    %vm240 = vcmp.lt.s32.totalorder %v218, 4
    %v241 = vsel %vm237, %v221, %v224
    %v242 = vsel %vm240, %v230, 2102212464
    %v243 = vsel %vm239, %v227, %v242
    %v244 = vsel %vm238, %v241, %v243
    %v245 = vsel %vm237, %v224, %v227
    %v246 = vsel %vm240, %v233, 920167782
    %v247 = vsel %vm239, %v230, %v246
    %v248 = vsel %vm238, %v245, %v247
    %v249 = vsel %vm237, %v227, %v230
    %v250 = vsel %vm240, %v236, 1326507024
    %v251 = vsel %vm239, %v233, %v250
    %v252 = vsel %vm238, %v249, %v251
    %v253 = vshll.u32 %v213, 8
    %v254 = vmul.u32.u64.compose %v253, %v252
    %v255 = vextract.low.u32 %v254
    %v256 = vextract.high.u32 %v254
    %v257 = vmul.u32.u64.compose %v253, %v248
    %v258 = vextract.low.u32 %v257
    %v259 = vextract.high.u32 %v257
    %v260 = vmul.u32 %v253, %v244
    %v261 = vadd.s32 %v256, %v258
    %vm262 = vc.u32 %v256, %v258
    %v263 = vadd.s32 %v259, 1
    %v264 = vsel %vm262, %v263, %v259
    %v265 = vadd.s32 %v260, %v264
    %v266 = vadd.s32 %v265, 536870912
    %v267 = vshrl.u32 %v266, 30
    %v268 = vshll.u32 %v267, 30
    %v269 = vsub.s32 %v265, %v268
    %vm270 = vcmp.lt.s32.totalorder %v269, 0
    %v271 = vsub.s32 0, %v269
    %v272 = vsel %vm270, %v271, %v269
    %v273 = vclz %v272
    %v274 = vsub.s32 %v273, 2
    %vm275 = vcmp.gt.s32.totalorder 0, %v274
    %v276 = vsel %vm275, 0, %v274
    %v277 = vsub.s32 32, %v276
    %v278 = vshll.u32 %v269, %v276
    %v279 = vshrl.u32 %v261, %v277
    %v280 = vor.u32 %v278, %v279
    %v281 = vsub.s32 4294967266, %v276
    %v282 = vadd.s32 %v281, 127
    %v283 = vshll.u32 %v282, 23
    %v284 = vor.u32 4788187, %v283
    %v285 = vand.u32 2147483647, %v284
    %v287 = vcvt.s32.f32 %v280
    %v288 = vmul.f32 %v287, %v285
    %v289 = vxor.u32 %v288, 2147483648
    %v290 = vsel %vm207, %v289, %v288
    %v291 = vsub.s32 4, %v267
    %v292 = vsel %vm207, %v291, %v267
    %v293 = vsel %vm206, %v98, %v290
    %v294 = vsel %vm206, 0, %v292
    %v295 = vcosq.f32.pop %v293
    %v296 = vsinq.f32.pop %v293
    %vm297 = vweird.f32 %v98
    %v298 = vadd.s32 %v294, 3
    %v299 = vand.u32 %v298, 3
    %vm300 = vcmp.lt.s32.totalorder %v299, 2
    %vm301 = vcmp.eq.s32.totalorder %v299, 0
    %v302 = vxor.u32 %v296, 2147483648
    %v303 = vsel %vm301, %v295, %v302
    %vm304 = vcmp.eq.s32.totalorder %v299, 2
    %v305 = vxor.u32 %v295, 2147483648
    %v306 = vsel %vm304, %v305, %v296
    %v307 = vsel %vm300, %v303, %v306
    %v308 = vsel %vm297, nan, %v307
    %vm309 = vcmask 261120
    %310 = vst.msk [vmem:[#allocation2] sm:$0xff] %vm309, %v204
    %311 = vst.msk [vmem:[#allocation2 + $0x8] sm:$0xff] %vm309, %v308
    // Predicated region
    $region10: #{tpu_custom_call.1} parent=1 // pred_check
      _
    $region11: #{tpu_custom_call.1} parent=1 // pred_check_branch
      %313 = sbr.rel (0) target = $region13
    $region12: #{tpu_custom_call.1} parent=1 // pred_region
      %s315 = ssub.s32 256, 256
      %316 = vsyncadd [#allocation3], %s315
      %s317 = sshll.u32 [#allocation2], 4
      %s318 = int_to_ptr.vmem [resolvable:$true] %s317
      %323 = dma.vmem_to_hbm [thread:$0]  %s318, 256, %s2, [#allocation3], 128, 128, 8
    $region13: #{tpu_custom_call.1} parent=1 // pred_fallthru
      _
    // Predicated region
    $region14: #{tpu_custom_call.1} parent=1 // pred_check
      _
    $region15: #{tpu_custom_call.1} parent=1 // pred_check_branch
      %325 = sbr.rel (0) target = $region17
    $region16: #{tpu_custom_call.1} parent=1 // pred_region
      %326 = dma.done [#allocation3], 256
    $region17: #{tpu_custom_call.1} parent=1 // pred_fallthru
      _
    %327 = vsyncpa [#allocation3], 1

</llo_original>
